<compile_context>
chip_gen: v6e
topology: v6e:2x2x1
jax: 0.10.0
libtpu: 0.0.40
codegen_flags: <defaults>
</compile_context>

<pallas_src>
import functools

import numpy as np

import jax
import jax.numpy as jnp
from jax.experimental import pallas as pl
from jax.experimental.pallas import tpu as pltpu


# ---------------------------------------------------------------------------
# Data / vocab setup (mirrors the PyTorch tutorial script)
# ---------------------------------------------------------------------------
data = [
    ("me gusta comer en la cafeteria".split(), "SPANISH"),
    ("Give it to me".split(), "ENGLISH"),
    ("No creo que sea una buena idea".split(), "SPANISH"),
    ("No it is not a good idea to get lost at sea".split(), "ENGLISH"),
]

wordToIx = {}
for sent, _ in data:
    for word in sent:
        if word not in wordToIx:
            wordToIx[word] = len(wordToIx)

VOCAB_SIZE = len(wordToIx)   # 26
NUM_LABELS = 2

# K (vocab) tile cap.  bf16 x tiles of (128, 4096) double-buffered are ~2 MiB.
TK_MAX = 4096


def _round_up(x, m):
    return ((x + m - 1) // m) * m


def padded_dims(batch, vocab, tk_max=TK_MAX):
    """Hardware-friendly padded sizes (B: sublanes, V: lanes, L_out: 128)."""
    l_pad = 128                                   # lane-dense output store
    b_pad = _round_up(max(batch, 1), 8)
    if b_pad > 128:
        b_pad = _round_up(b_pad, 128)
    v_pad = _round_up(max(vocab, 1), 128)
    if v_pad > tk_max:
        v_pad = _round_up(v_pad, tk_max)
    return b_pad, v_pad, l_pad


def prepare_bow_params(weight, bias, v_pad, l_pad):
    """One-time parameter prep (outside the per-call path).

    Weight keeps its natural (L, V) layout -- the large V axis stays the
    minor/lane axis, so there is no 64x lane-pad of the weight stream -- and
    is cast to bf16 to halve HBM bytes.  Bias is padded to the lane-dense
    output width and kept f32 (used only in the f32 epilogue).
    """
    num_labels, vocab = weight.shape
    w_pad = jnp.zeros((num_labels, v_pad), jnp.bfloat16).at[:, :vocab].set(
        weight.astype(jnp.bfloat16))
    b_pad = jnp.zeros((1, l_pad), jnp.float32).at[:, :num_labels].set(bias)
    return w_pad, b_pad


def make_bow_batch(sentences, word_to_ix, b_pad, v_pad):
    """JAX/numpy equivalent of makeBowVector for a batch, built directly at
    the padded (b_pad, v_pad) shape (no extra device-side pad copy of x)."""
    vecs = np.zeros((b_pad, v_pad), dtype=np.float32)
    for i, sent in enumerate(sentences):
        for word in sent:
            vecs[i, word_to_ix[word]] += 1.0
    # Counts are small integers -> exactly representable in bf16.
    return jnp.asarray(vecs, dtype=jnp.bfloat16)


# ---------------------------------------------------------------------------
# Kernel: logits = x @ W.T + b ; out = log_softmax(logits, axis=-1)
#
# Grid: (batch tiles, K tiles over the vocab).  The output block index is
# constant across K, so o_ref stays VMEM-resident and is used directly as the
# accumulator; the epilogue (bias + masked log_softmax) runs on the last K
# step, in place.
# ---------------------------------------------------------------------------
def bow_classifier_kernel(x_ref, w_ref, b_ref, o_ref, *, num_labels):
    k = pl.program_id(1)
    last_k = pl.num_programs(1) - 1

    @pl.when(k == 0)
    def _():
        o_ref[...] = jnp.zeros_like(o_ref)

    # Per-label dot-product contribution for this K tile:
    #   p[b, l] += sum_v x[b, v] * w[l, v]
    # VPU multiply + XLU lane reduction; with only num_labels=2 columns this
    # avoids both an MXU pass that would be ~98% idle on N and a lane-padded
    # weight stream.  bf16 operands are unpacked to f32 in-register (v5e-safe).
    x = x_ref[...].astype(jnp.float32)                     # (tb, tk)
    w = w_ref[...].astype(jnp.float32)                     # (L, tk)

    lane = jax.lax.broadcasted_iota(jnp.int32, o_ref.shape, dimension=1)
    contrib = jnp.zeros(o_ref.shape, jnp.float32)
    for l in range(num_labels):                            # static, unrolled
        p_l = jnp.sum(x * w[l:l + 1, :], axis=-1, keepdims=True)   # (tb, 1)
        contrib = contrib + jnp.where(lane == l, p_l, 0.0)
    o_ref[...] += contrib                                  # accumulate in place

    @pl.when(k == last_k)
    def _():
        logits = o_ref[...] + b_ref[...]                   # (tb, L_pad)
        # Mask padded label lanes so the cross-lane reductions ignore them.
        masked = jnp.where(lane < num_labels, logits, -jnp.inf)
        # Numerically-stable log_softmax over the last axis (f32 epilogue).
        m = jnp.max(masked, axis=-1, keepdims=True)
        shifted = masked - m
        lse = jnp.log(jnp.sum(jnp.exp(shifted), axis=-1, keepdims=True))
        o_ref[...] = shifted - lse


def bow_classifier_forward(x_pad, w_pad, b_pad, *, tk_max=TK_MAX):
    """x_pad: (B_pad, V_pad) bf16, w_pad: (L, V_pad) bf16, b_pad: (1, L_pad) f32
    -> (B_pad, L_pad) f32 log-probs (caller slices to (B, L))."""
    b_pad_dim, v_pad = x_pad.shape
    num_labels = w_pad.shape[0]
    l_pad = b_pad.shape[1]

    tb = b_pad_dim if b_pad_dim <= 128 else 128
    tk = v_pad if v_pad <= tk_max else tk_max
    assert b_pad_dim % tb == 0 and v_pad % tk == 0

    grid = (b_pad_dim // tb, v_pad // tk)

    cost = pl.CostEstimate(
        flops=2 * b_pad_dim * v_pad * num_labels,          # real L, not L_pad
        transcendentals=2 * b_pad_dim * num_labels,        # exp + log
        bytes_accessed=(
            x_pad.size * x_pad.dtype.itemsize              # x streamed once
            + grid[0] * w_pad.size * w_pad.dtype.itemsize  # W per batch-tile pass
            + b_pad.size * 4
            + b_pad_dim * l_pad * 4
        ),
    )

    return pl.pallas_call(
        functools.partial(bow_classifier_kernel, num_labels=num_labels),
        out_shape=jax.ShapeDtypeStruct((b_pad_dim, l_pad), jnp.float32),
        grid_spec=pltpu.PrefetchScalarGridSpec(
            num_scalar_prefetch=0,
            grid=grid,
            in_specs=[
                pl.BlockSpec((tb, tk), lambda i, k: (i, k)),           # x tile
                pl.BlockSpec((num_labels, tk), lambda i, k: (0, k)),   # W tile
                pl.BlockSpec((1, l_pad), lambda i, k: (0, 0)),         # bias
            ],
            out_specs=pl.BlockSpec((tb, l_pad), lambda i, k: (i, 0)),
        ),
        compiler_params=pltpu.CompilerParams(
            dimension_semantics=("parallel", "arbitrary"),
        ),
        cost_estimate=cost,
    )(x_pad, w_pad, b_pad)


# ---------------------------------------------------------------------------
# Main
# ---------------------------------------------------------------------------
if __name__ == "__main__":
    B = len(data)          # 4
    V = VOCAB_SIZE         # 26
    L = NUM_LABELS         # 2

    B_pad, V_pad, L_pad = padded_dims(B, V)

    key = jax.random.PRNGKey(0)
    k_w, k_b = jax.random.split(key)

    # Deterministic init mimicking nn.Linear: U(-1/sqrt(V), 1/sqrt(V)).
    bound = 1.0 / (V ** 0.5)
    weight = jax.random.uniform(
        k_w, (L, V), jnp.float32, minval=-bound, maxval=bound)
    bias = jax.random.uniform(
        k_b, (L,), jnp.float32, minval=-bound, maxval=bound)

    # Parameter prep done once, outside the per-call path.
    w_pad, b_pad = prepare_bow_params(weight, bias, V_pad, L_pad)

    # BoW count matrix built directly at the padded shape (one pallas_call
    # for the whole batch of sentences).
    x_pad = make_bow_batch([s for s, _ in data], wordToIx, B_pad, V_pad)

    out_pad = bow_classifier_forward(x_pad, w_pad, b_pad)
    out_pad = jax.block_until_ready(out_pad)
    out = out_pad[:B, :L]

    # Reference checks in plain JAX.
    x_f32 = x_pad[:B, :V].astype(jnp.float32)          # counts are exact in bf16
    w_rt = w_pad[:, :V].astype(jnp.float32)            # bf16-rounded weights
    ref_bf16_params = jax.nn.log_softmax(x_f32 @ w_rt.T + bias, axis=-1)
    ref_full_f32 = jax.nn.log_softmax(x_f32 @ weight.T + bias, axis=-1)

    assert out.shape == (B, L)
    # Tight check against the same (bf16-rounded) parameters the kernel used.
    assert jnp.allclose(out, ref_bf16_params, atol=1e-4, rtol=1e-4)
    # Looser semantic check against the full-precision reference.
    assert jnp.allclose(out, ref_full_f32, atol=5e-2, rtol=5e-2)

    print("KERNEL_OK")
</pallas_src>

<mosaic_0001>
module attributes {stable_mosaic.version = 11 : i64} {
  func.func @bow_classifier_kernel(%arg0: i32, %arg1: i32, %arg2: memref<8x128xbf16, #tpu.memory_space<vmem>>, %arg3: memref<2x128xbf16, #tpu.memory_space<vmem>>, %arg4: memref<1x128xf32, #tpu.memory_space<vmem>>, %arg5: memref<8x128xf32, #tpu.memory_space<vmem>>) attributes {dimension_semantics = [#tpu.dimension_semantics<parallel>, #tpu.dimension_semantics<arbitrary>], iteration_bounds = array<i64: 1, 1>, scalar_prefetch = 0 : i64, scratch_operands = 0 : i64, tpu.core_type = #tpu.core_type<tc>, window_params = [{transform_indices = @transform_0, window_bounds = array<i64: 8, 128>}, {transform_indices = @transform_1, window_bounds = array<i64: 2, 128>}, {pipeline_mode = #tpu.pipeline_mode<synchronous>, transform_indices = @transform_2, window_bounds = array<i64: 1, 128>}, {transform_indices = @transform_3, window_bounds = array<i64: 8, 128>}]} {
    %c0_i32 = arith.constant 0 : i32
    %0 = arith.cmpi eq, %arg1, %c0_i32 : i32
    %1 = arith.extui %0 : i1 to i32
    %c0_i32_0 = arith.constant 0 : i32
    %2 = arith.cmpi ne, %1, %c0_i32_0 : i32
    scf.if %2 {
      %cst_15 = arith.constant 0.000000e+00 : f32
      %39 = vector.broadcast %cst_15 : f32 to vector<8x128xf32>
      %c0_16 = arith.constant 0 : index
      %c0_17 = arith.constant 0 : index
      %40 = vector.load %arg5[%c0_16, %c0_17] : memref<8x128xf32, #tpu.memory_space<vmem>>, vector<8x128xf32>
      tpu.vector_store %arg5[%c0_16, %c0_17], %39 {strides = array<i32>} : memref<8x128xf32, #tpu.memory_space<vmem>>, vector<8x128xf32>,
    } else {
    }
    %c0 = arith.constant 0 : index
    %c0_1 = arith.constant 0 : index
    %3 = vector.load %arg2[%c0, %c0_1] : memref<8x128xbf16, #tpu.memory_space<vmem>>, vector<8x128xbf16>
    %4 = arith.extf %3 : vector<8x128xbf16> to vector<8x128xf32>
    %c0_2 = arith.constant 0 : index
    %c0_3 = arith.constant 0 : index
    %5 = vector.load %arg3[%c0_2, %c0_3] : memref<2x128xbf16, #tpu.memory_space<vmem>>, vector<2x128xbf16>
    %6 = arith.extf %5 : vector<2x128xbf16> to vector<2x128xf32>
    %7 = tpu.iota {dimensions = array<i32: 1>} : vector<8x128xi32>
    %cst = arith.constant 0.000000e+00 : f32
    %8 = vector.broadcast %cst : f32 to vector<8x128xf32>
    %9 = vector.extract_strided_slice %6 {offsets = [0, 0], sizes = [1, 128], strides = [1, 1]} : vector<2x128xf32> to vector<1x128xf32>
    %10 = vector.broadcast %9 : vector<1x128xf32> to vector<8x128xf32>
    %11 = arith.mulf %4, %10 : vector<8x128xf32>
    %cst_4 = arith.constant dense<0.000000e+00> : vector<8xf32>
    %12 = vector.multi_reduction <add>, %11, %cst_4 [1] : vector<8x128xf32> to vector<8xf32>
    %13 = vector.shape_cast %12 : vector<8xf32> to vector<8x1xf32>
    %c0_i32_5 = arith.constant 0 : i32
    %14 = vector.broadcast %c0_i32_5 : i32 to vector<8x128xi32>
    %15 = arith.cmpi eq, %7, %14 : vector<8x128xi32>
    %cst_6 = arith.constant 0.000000e+00 : f32
    %16 = vector.shape_cast %13 : vector<8x1xf32> to vector<8x1xf32>
    %17 = vector.broadcast %16 : vector<8x1xf32> to vector<8x128xf32>
    %18 = vector.broadcast %cst_6 : f32 to vector<8x128xf32>
    %19 = arith.select %15, %17, %18 : vector<8x128xi1>, vector<8x128xf32>
    %20 = arith.addf %8, %19 : vector<8x128xf32>
    %21 = vector.extract_strided_slice %6 {offsets = [1, 0], sizes = [1, 128], strides = [1, 1]} : vector<2x128xf32> to vector<1x128xf32>
    %22 = vector.broadcast %21 : vector<1x128xf32> to vector<8x128xf32>
    %23 = arith.mulf %4, %22 : vector<8x128xf32>
    %cst_7 = arith.constant dense<0.000000e+00> : vector<8xf32>
    %24 = vector.multi_reduction <add>, %23, %cst_7 [1] : vector<8x128xf32> to vector<8xf32>
    %25 = vector.shape_cast %24 : vector<8xf32> to vector<8x1xf32>
    %c1_i32 = arith.constant 1 : i32
    %26 = vector.broadcast %c1_i32 : i32 to vector<8x128xi32>
    %27 = arith.cmpi eq, %7, %26 : vector<8x128xi32>
    %cst_8 = arith.constant 0.000000e+00 : f32
    %28 = vector.shape_cast %25 : vector<8x1xf32> to vector<8x1xf32>
    %29 = vector.broadcast %28 : vector<8x1xf32> to vector<8x128xf32>
    %30 = vector.broadcast %cst_8 : f32 to vector<8x128xf32>
    %31 = arith.select %27, %29, %30 : vector<8x128xi1>, vector<8x128xf32>
    %32 = arith.addf %20, %31 : vector<8x128xf32>
    %c0_9 = arith.constant 0 : index
    %c0_10 = arith.constant 0 : index
    %33 = vector.load %arg5[%c0_9, %c0_10] : memref<8x128xf32, #tpu.memory_space<vmem>>, vector<8x128xf32>
    %34 = arith.addf %33, %32 : vector<8x128xf32>
    %c0_11 = arith.constant 0 : index
    %c0_12 = arith.constant 0 : index
    %35 = vector.load %arg5[%c0_11, %c0_12] : memref<8x128xf32, #tpu.memory_space<vmem>>, vector<8x128xf32>
    tpu.vector_store %arg5[%c0_11, %c0_12], %34 {strides = array<i32>} : memref<8x128xf32, #tpu.memory_space<vmem>>, vector<8x128xf32>,
    %c0_i32_13 = arith.constant 0 : i32
    %36 = arith.cmpi eq, %arg1, %c0_i32_13 : i32
    %37 = arith.extui %36 : i1 to i32
    %c0_i32_14 = arith.constant 0 : i32
    %38 = arith.cmpi ne, %37, %c0_i32_14 : i32
    scf.if %38 {
      %c0_15 = arith.constant 0 : index
      %c0_16 = arith.constant 0 : index
      %39 = vector.load %arg5[%c0_15, %c0_16] : memref<8x128xf32, #tpu.memory_space<vmem>>, vector<8x128xf32>
      %c0_17 = arith.constant 0 : index
      %c0_18 = arith.constant 0 : index
      %40 = vector.load %arg4[%c0_17, %c0_18] : memref<1x128xf32, #tpu.memory_space<vmem>>, vector<1x128xf32>
      %41 = vector.broadcast %40 : vector<1x128xf32> to vector<8x128xf32>
      %42 = arith.addf %39, %41 : vector<8x128xf32>
      %c2_i32 = arith.constant 2 : i32
      %43 = vector.broadcast %c2_i32 : i32 to vector<8x128xi32>
      %44 = arith.cmpi slt, %7, %43 : vector<8x128xi32>
      %cst_19 = arith.constant 0xFF800000 : f32
      %45 = vector.broadcast %cst_19 : f32 to vector<8x128xf32>
      %46 = arith.select %44, %42, %45 : vector<8x128xi1>, vector<8x128xf32>
      %cst_20 = arith.constant dense<0xFF800000> : vector<8xf32>
      %47 = vector.multi_reduction <maximumf>, %46, %cst_20 [1] : vector<8x128xf32> to vector<8xf32>
      %48 = vector.shape_cast %47 : vector<8xf32> to vector<8x1xf32>
      %49 = vector.broadcast %48 : vector<8x1xf32> to vector<8x128xf32>
      %50 = arith.subf %46, %49 : vector<8x128xf32>
      %51 = math.exp %50 : vector<8x128xf32>
      %cst_21 = arith.constant dense<0.000000e+00> : vector<8xf32>
      %52 = vector.multi_reduction <add>, %51, %cst_21 [1] : vector<8x128xf32> to vector<8xf32>
      %53 = vector.shape_cast %52 : vector<8xf32> to vector<8x1xf32>
      %54 = math.log %53 : vector<8x1xf32>
      %55 = vector.broadcast %54 : vector<8x1xf32> to vector<8x128xf32>
      %56 = arith.subf %50, %55 : vector<8x128xf32>
      %c0_22 = arith.constant 0 : index
      %c0_23 = arith.constant 0 : index
      %57 = vector.load %arg5[%c0_22, %c0_23] : memref<8x128xf32, #tpu.memory_space<vmem>>, vector<8x128xf32>
      tpu.vector_store %arg5[%c0_22, %c0_23], %56 {strides = array<i32>} : memref<8x128xf32, #tpu.memory_space<vmem>>, vector<8x128xf32>,
    } else {
    }
    return
  }
  func.func @transform_0(%arg0: i32, %arg1: i32) -> (i32, i32) {
    %c0_i32 = arith.constant 0 : i32
    return %arg0, %arg1 : i32, i32
  }
  func.func @transform_1(%arg0: i32, %arg1: i32) -> (i32, i32) {
    %c0_i32 = arith.constant 0 : i32
    %c0_i32_0 = arith.constant 0 : i32
    return %c0_i32, %arg1 : i32, i32
  }
  func.func @transform_2(%arg0: i32, %arg1: i32) -> (i32, i32) {
    %c0_i32 = arith.constant 0 : i32
    %c0_i32_0 = arith.constant 0 : i32
    %c0_i32_1 = arith.constant 0 : i32
    return %c0_i32, %c0_i32_0 : i32, i32
  }
  func.func @transform_3(%arg0: i32, %arg1: i32) -> (i32, i32) {
    %c0_i32 = arith.constant 0 : i32
    %c0_i32_0 = arith.constant 0 : i32
    return %arg0, %c0_i32 : i32, i32
  }
}

</mosaic_0001>

<llo_original>
// kernel: tpu_custom_call.1
$region0: #{tpu_custom_call.1}
  #allocation0 [shape = 'u32[]', space=smem, size = 0x4, offset = 0x4, fixed_abs, tag = 'smem constant byte address 0x4 - core index']
  #allocation1 [shape = 'u32[144,128]{1,0:T(1,128)}', space=vmem, size = 0x12000, scoped, tag = 'internal scratch']
  %s0 = inlined_call_operand.hbm [shape: bf16[8,128], index: 0, kind: input, shape index: {}]
  %s1 = inlined_call_operand.vmem [shape: bf16[2,128], index: 1, kind: input, shape index: {}]
  %s2 = inlined_call_operand.vmem [shape: f32[1,128], index: 2, kind: input, shape index: {}]
  %s3 = inlined_call_operand.hbm [shape: f32[8,128], index: 3, kind: output, shape index: {}]
  %s4 = sld [smem:[#allocation0]]
  $region34: #{tpu_custom_call.1} parent=0
    _
  %s6 = ssub.s32 1, %s4
  %s7 = scalar_select 0, %s6, %s4
  $region1: #{tpu_custom_call.1} parent=0
    #allocation2 [shape = 'u8[2048]{0}', space=vmem, size = 0x800, scoped, tag = 'input window, operand 0, single buffered']
    #allocation3 [shape = 's32[1]{0}', space=sflag, size = 0x4, scoped, tag = 'scoped memory for tpu_custom_call.1']
    #allocation4 [shape = 's32[1]{0}', space=sflag, size = 0x4, scoped, tag = 'scoped memory for tpu_custom_call.1']
    #allocation5 [shape = 'u8[4096]{0}', space=vmem, size = 0x1000, scoped, tag = 'output window, operand 0, single buffered']
    %8 = vsyncpa [#allocation3], 0
    %9 = vsyncpa [#allocation4], 0
    // Predicated region
    $region2: #{tpu_custom_call.1} parent=1 // pred_check
      _
    $region3: #{tpu_custom_call.1} parent=1 // pred_check_branch
      %11 = sbr.rel (0) target = $region5
    $region4: #{tpu_custom_call.1} parent=1 // pred_region
      %s13 = ssub.s32 64, 64
      %14 = vsyncadd [#allocation3], %s13
      %s16 = sshll.u32 [#allocation2], 4
      %s17 = int_to_ptr.vmem [resolvable:$true] %s16
      %19 = dma.hbm_to_vmem [thread:$0]  %s0, 64, %s17, [#allocation3]
    $region5: #{tpu_custom_call.1} parent=1 // pred_fallthru
      _
    // Predicated region
    $region6: #{tpu_custom_call.1} parent=1 // pred_check
      _
    $region7: #{tpu_custom_call.1} parent=1 // pred_check_branch
      %21 = sbr.rel (0) target = $region9
    $region8: #{tpu_custom_call.1} parent=1 // pred_region
      _
    $region9: #{tpu_custom_call.1} parent=1 // pred_fallthru
      _
    // Predicated region
    $region10: #{tpu_custom_call.1} parent=1 // pred_check
      _
    $region11: #{tpu_custom_call.1} parent=1 // pred_check_branch
      %23 = sbr.rel (0) target = $region13
    $region12: #{tpu_custom_call.1} parent=1 // pred_region
      _
    $region13: #{tpu_custom_call.1} parent=1 // pred_fallthru
      _
    // Predicated region
    $region14: #{tpu_custom_call.1} parent=1 // pred_check
      _
    $region15: #{tpu_custom_call.1} parent=1 // pred_check_branch
      %25 = sbr.rel (0) target = $region17
    $region16: #{tpu_custom_call.1} parent=1 // pred_region
      %26 = dma.done [#allocation3], 64
    $region17: #{tpu_custom_call.1} parent=1 // pred_fallthru
      _
    %p27 = scmp.eq.s32.totalorder 0, 0
    // Predicated region
    $region18: #{tpu_custom_call.1} parent=1 // pred_check
      %p28 = pneg %p27
    $region19: #{tpu_custom_call.1} parent=1 // pred_check_branch
      %30 = sbr.rel (%p28) target = $region21
    $region20: #{tpu_custom_call.1} parent=1 // pred_region
      %31 = vst [vmem:[#allocation5] sm:$0xff] 0.0
    $region21: #{tpu_custom_call.1} parent=1 // pred_fallthru
      _
    %v32 = vld [vmem:[#allocation2] sm:$0xf]
    %v33 = vunpack.c.l.bf16 %v32
    %v34 = vld [vmem:[%s1] sm:$0x1]
    %v35 = vunpack.c.l.bf16 %v34
    %v36 = vlaneseq
    %v37 = vand.u32 %v36, 127
    %v38 = vlaneseq
    %v39 = vshrl.u32 %v38, 7
    %v40 = vsub.s32 0, %v39
    %v41 = vrot.slane %v35, %v40
    %v42 = vmul.f32 %v33, %v41
    %43 = vadd.xlane.f32.xlu0 %v42
    %v44 = vpop.xlane.xlu0 %43
    %vm45 = vcmp.eq.s32.totalorder %v37, 0
    %v46 = vsel %vm45, %v44, 0.0
    %v47 = vadd.f32 %v46, 0.0
    %v48 = vlaneseq
    %v49 = vshrl.u32 %v48, 7
    %v50 = vsub.s32 1, %v49
    %v51 = vrot.slane %v35, %v50
    %v52 = vmul.f32 %v33, %v51
    %53 = vadd.xlane.f32.xlu0 %v52
    %v54 = vpop.xlane.xlu0 %53
    %vm55 = vcmp.eq.s32.totalorder %v37, 1
    %v56 = vsel %vm55, %v54, 0.0
    %v57 = vadd.f32 %v47, %v56
    %v58 = vld [vmem:[#allocation5] sm:$0xff]
    %v59 = vadd.f32 %v58, %v57
    %60 = vst [vmem:[#allocation5] sm:$0xff] %v59
    // Predicated region
    $region22: #{tpu_custom_call.1} parent=1 // pred_check
      %p61 = pneg %p27
    $region23: #{tpu_custom_call.1} parent=1 // pred_check_branch
      %63 = sbr.rel (%p61) target = $region25
    $region24: #{tpu_custom_call.1} parent=1 // pred_region
      %v64 = vld [vmem:[#allocation5] sm:$0xff]
      %v65 = vld [vmem:[%s2] sm:$0x1]
      %v67 = vlaneseq
      %v68 = vshrl.u32 %v67, 7
      %v69 = vsub.s32 0, %v68
      %v70 = vrot.slane %v65, %v69
      %v72 = vadd.f32 %v64, %v70
      %vm73 = vcmp.lt.s32.totalorder %v37, 2
      %v74 = vsel %vm73, %v72, -inf
      %75 = vmax.xlane.f32.xlu0 %v74
      %v76 = vpop.xlane.xlu0 %75
      %v77 = vsub.f32 %v74, %v76
      %v78 = vmul.f32 %v77, 1.442695
      %v79 = vpow.pop %v78
      %80 = vadd.xlane.f32.xlu0 %v79
      %v81 = vpop.xlane.xlu0 %80
      %v82 = vlog2.pop %v81
      %v83 = vmul.f32 %v82, 0.6931472
      %v84 = vsub.f32 %v77, %v83
      %85 = vst [vmem:[#allocation5] sm:$0xff] %v84
    $region25: #{tpu_custom_call.1} parent=1 // pred_fallthru
      _
    // Predicated region
    $region26: #{tpu_custom_call.1} parent=1 // pred_check
      _
    $region27: #{tpu_custom_call.1} parent=1 // pred_check_branch
      %87 = sbr.rel (0) target = $region29
    $region28: #{tpu_custom_call.1} parent=1 // pred_region
      %s89 = ssub.s32 128, 128
      %90 = vsyncadd [#allocation4], %s89
      %s92 = sshll.u32 [#allocation5], 4
      %s93 = int_to_ptr.vmem [resolvable:$true] %s92
      %95 = dma.vmem_to_hbm [thread:$0]  %s93, 128, %s3, [#allocation4]
    $region29: #{tpu_custom_call.1} parent=1 // pred_fallthru
      _
    // Predicated region
    $region30: #{tpu_custom_call.1} parent=1 // pred_check
      _
    $region31: #{tpu_custom_call.1} parent=1 // pred_check_branch
      %97 = sbr.rel (0) target = $region33
    $region32: #{tpu_custom_call.1} parent=1 // pred_region
      %98 = dma.done [#allocation4], 128
    $region33: #{tpu_custom_call.1} parent=1 // pred_fallthru
      _
    %99 = vsyncpa [#allocation3], 1
    %100 = vsyncpa [#allocation4], 1

</llo_original>
